<compile_context>
chip_gen: v7x
topology: tpu7x:2x2x1
jax: 0.10.0
libtpu: 0.0.40
codegen_flags: <defaults>
</compile_context>

<pallas_src>
import jax
import jax.numpy as jnp
from jax import lax
from jax.experimental import pallas as pl
from jax.experimental.pallas import tpu as pltpu

OBS_DIM = 8       # env.observation_space.shape[0] for LunarLander-v2
N_ACTIONS = 4     # env.action_space.n for LunarLander-v2
HIDDEN = 28

HID_PAD = 32      # hidden 28 padded to 32 (sublane-friendly)
HEAD_PAD = 8      # 4 action logits + 1 value padded to 8 rows
RAND_ROWS = 40    # rows 0:32 dropout uniforms, rows 32:36 Gumbel uniforms

DROPOUT_P = 0.3
INV_KEEP = 1.0 / (1.0 - DROPOUT_P)

LANE = 128
TB_MAX = 2048     # batch tile (lanes) per grid step; small vs VMEM on all gens


def _round_up(x, m):
    return ((x + m - 1) // m) * m


def policy_net_kernel(x_ref, u_ref, w1_ref, b1_ref, whd_ref, bhd_ref,
                      act_ref, fv_ref):
    # x_ref: (OBS_DIM, TB)  -- batch rides the lane axis.
    x = x_ref[...]

    # input_layer: (32, 8) @ (8, TB) + (32, 1)   (rows 28:32 are zero pad)
    h = jnp.dot(w1_ref[...], x, preferred_element_type=jnp.float32) + b1_ref[...]

    # F.dropout(p=0.3, training) fused with relu:
    #   relu(mask * h / keep) == where(keep, relu(h) / keep, 0)
    u_drop = u_ref[0:HID_PAD, :]                           # (32, TB)
    h = jnp.where(u_drop >= DROPOUT_P, jnp.maximum(h, 0.0) * INV_KEEP, 0.0)

    # fused action/value head: (8, 32) @ (32, TB) + (8, 1)
    # rows 0:4 = action logits, row 4 = state value, rows 5:8 = zero pad
    z = jnp.dot(whd_ref[...], h, preferred_element_type=jnp.float32) + bhd_ref[...]
    logits = z[0:N_ACTIONS, :]                             # (4, TB)
    value = z[N_ACTIONS:N_ACTIONS + 1, :]                  # (1, TB)

    # numerically stable log-softmax over the (sublane) action axis
    m = jnp.max(logits, axis=0, keepdims=True)
    s = logits - m
    lse = jnp.log(jnp.sum(jnp.exp(s), axis=0, keepdims=True))
    log_probs = s - lse                                    # (4, TB)

    # Categorical sample via Gumbel-max
    u_g = u_ref[HID_PAD:HID_PAD + N_ACTIONS, :]            # (4, TB)
    gumbel = -jnp.log(-jnp.log(u_g + 1e-20) + 1e-20)
    perturbed = logits + gumbel
    idx = lax.broadcasted_iota(jnp.int32, perturbed.shape, 0)
    pmax = jnp.max(perturbed, axis=0, keepdims=True)
    action = jnp.min(jnp.where(perturbed >= pmax, idx, jnp.int32(N_ACTIONS)),
                     axis=0, keepdims=True)                # (1, TB) int32
    act_ref[...] = action

    # log_prob of the sampled action (one-hot masked sublane sum)
    logp = jnp.sum(jnp.where(idx == action, log_probs, 0.0),
                   axis=0, keepdims=True)                  # (1, TB)
    fv_ref[0:1, :] = logp
    fv_ref[1:2, :] = value


def pack_params(w1, b1, wa, ba, wv, bv):
    """Pad / fuse logical (PyTorch-layout) params into kernel-ready buffers."""
    # w1 (28, 8), b1 (28,), wa (4, 28), ba (4,), wv (1, 28), bv (1,)
    w1p = jnp.zeros((HID_PAD, OBS_DIM), jnp.float32).at[:HIDDEN, :].set(w1)
    b1p = jnp.zeros((HID_PAD, 1), jnp.float32).at[:HIDDEN, 0].set(b1)
    whd = jnp.zeros((HEAD_PAD, HID_PAD), jnp.float32)
    whd = whd.at[:N_ACTIONS, :HIDDEN].set(wa)
    whd = whd.at[N_ACTIONS, :HIDDEN].set(wv[0])
    bhd = jnp.zeros((HEAD_PAD, 1), jnp.float32)
    bhd = bhd.at[:N_ACTIONS, 0].set(ba)
    bhd = bhd.at[N_ACTIONS, 0].set(bv[0])
    return w1p, b1p, whd, bhd


def policy_net_forward(state, packed_params, key):
    """Policy_Net forward in one Pallas call.

    Returns (action[int32 (B,)], log_prob[(B,)], state_value[(B, 1)]).
    """
    w1p, b1p, whd, bhd = packed_params
    B = state.shape[0]

    if B <= TB_MAX:
        tb = _round_up(B, LANE)
        b_pad = tb
    else:
        tb = TB_MAX
        b_pad = _round_up(B, tb)
    grid_b = b_pad // tb

    # batch-on-lanes layout: (features, batch), zero-pad batch to b_pad lanes
    x_t = jnp.zeros((OBS_DIM, b_pad), jnp.float32).at[:, :B].set(state.T)

    # one uniform draw per call: rows 0:32 dropout, rows 32:36 Gumbel
    u = jax.random.uniform(key, (RAND_ROWS, b_pad), jnp.float32)

    out_shapes = (
        jax.ShapeDtypeStruct((1, b_pad), jnp.int32),     # sampled action
        jax.ShapeDtypeStruct((2, b_pad), jnp.float32),   # [log_prob; value]
    )

    act, fv = pl.pallas_call(
        policy_net_kernel,
        out_shape=out_shapes,
        grid=(grid_b,),
        in_specs=[
            pl.BlockSpec((OBS_DIM, tb), lambda i: (0, i)),       # state^T
            pl.BlockSpec((RAND_ROWS, tb), lambda i: (0, i)),     # uniforms
            pl.BlockSpec((HID_PAD, OBS_DIM), lambda i: (0, 0)),  # w1 (padded)
            pl.BlockSpec((HID_PAD, 1), lambda i: (0, 0)),        # b1 (padded)
            pl.BlockSpec((HEAD_PAD, HID_PAD), lambda i: (0, 0)), # fused head W
            pl.BlockSpec((HEAD_PAD, 1), lambda i: (0, 0)),       # fused head b
        ],
        out_specs=(
            pl.BlockSpec((1, tb), lambda i: (0, i)),
            pl.BlockSpec((2, tb), lambda i: (0, i)),
        ),
        compiler_params=pltpu.CompilerParams(
            dimension_semantics=("parallel",)),
    )(x_t, u, w1p, b1p, whd, bhd)

    action = act[0, :B]
    log_prob = fv[0, :B]
    state_value = fv[1, :B].reshape(B, 1)
    return action, log_prob, state_value


def init_params(key):
    """nn.Linear-style init: U(-1/sqrt(fan_in), 1/sqrt(fan_in)), PyTorch (out, in) layout."""
    ks = jax.random.split(key, 6)

    def linear(kw, kb, fan_in, fan_out):
        bound = 1.0 / (fan_in ** 0.5)
        w = jax.random.uniform(kw, (fan_out, fan_in), jnp.float32, -bound, bound)
        b = jax.random.uniform(kb, (fan_out,), jnp.float32, -bound, bound)
        return w, b

    w1, b1 = linear(ks[0], ks[1], OBS_DIM, HIDDEN)     # input_layer
    wa, ba = linear(ks[2], ks[3], HIDDEN, N_ACTIONS)   # action_layer
    wv, bv = linear(ks[4], ks[5], HIDDEN, 1)           # Value_layer
    return (w1, b1, wa, ba, wv, bv)


# TODO(synk): the PyTorch module appends log_probs / state values to Python
# lists on `self` (side effects) and applies dropout unconditionally; here the
# saved quantities are returned as kernel outputs and dropout is always in
# training mode (add an eval path outside the kernel if needed).

if __name__ == "__main__":
    key = jax.random.PRNGKey(0)
    k_params, k_state, k_noise = jax.random.split(key, 3)

    params = init_params(k_params)
    packed = pack_params(*params)

    B = 4
    state = jax.random.normal(k_state, (B, OBS_DIM), dtype=jnp.float32)

    action, log_prob, state_value = policy_net_forward(state, packed, k_noise)
    jax.block_until_ready((action, log_prob, state_value))

    assert action.shape == (B,) and action.dtype == jnp.int32
    assert log_prob.shape == (B,)
    assert state_value.shape == (B, 1)
    assert bool(jnp.all((action >= 0) & (action < N_ACTIONS)))
    assert bool(jnp.all(log_prob <= 0.0))
    assert bool(jnp.all(jnp.isfinite(log_prob)))
    assert bool(jnp.all(jnp.isfinite(state_value)))

    print("KERNEL_OK")
</pallas_src>

<mosaic_0001>
module attributes {stable_mosaic.version = 11 : i64} {
  func.func @policy_net_kernel(%arg0: i32, %arg1: memref<8x128xf32, #tpu.memory_space<vmem>>, %arg2: memref<40x128xf32, #tpu.memory_space<vmem>>, %arg3: memref<32x8xf32, #tpu.memory_space<vmem>>, %arg4: memref<32x1xf32, #tpu.memory_space<vmem>>, %arg5: memref<8x32xf32, #tpu.memory_space<vmem>>, %arg6: memref<8x1xf32, #tpu.memory_space<vmem>>, %arg7: memref<1x128xi32, #tpu.memory_space<vmem>>, %arg8: memref<2x128xf32, #tpu.memory_space<vmem>>) attributes {dimension_semantics = [#tpu.dimension_semantics<parallel>], iteration_bounds = array<i64: 1>, scalar_prefetch = 0 : i64, scratch_operands = 0 : i64, tpu.core_type = #tpu.core_type<tc>, window_params = [{transform_indices = @transform_0, window_bounds = array<i64: 8, 128>}, {transform_indices = @transform_1, window_bounds = array<i64: 40, 128>}, {pipeline_mode = #tpu.pipeline_mode<synchronous>, transform_indices = @transform_2, window_bounds = array<i64: 32, 8>}, {pipeline_mode = #tpu.pipeline_mode<synchronous>, transform_indices = @transform_3, window_bounds = array<i64: 32, 1>}, {pipeline_mode = #tpu.pipeline_mode<synchronous>, transform_indices = @transform_4, window_bounds = array<i64: 8, 32>}, {pipeline_mode = #tpu.pipeline_mode<synchronous>, transform_indices = @transform_5, window_bounds = array<i64: 8, 1>}, {transform_indices = @transform_6, window_bounds = array<i64: 1, 128>}, {transform_indices = @transform_7, window_bounds = array<i64: 2, 128>}]} {
    %c0 = arith.constant 0 : index
    %c0_0 = arith.constant 0 : index
    %0 = vector.load %arg1[%c0, %c0_0] : memref<8x128xf32, #tpu.memory_space<vmem>>, vector<8x128xf32>
    %c0_1 = arith.constant 0 : index
    %c0_2 = arith.constant 0 : index
    %1 = vector.load %arg3[%c0_1, %c0_2] : memref<32x8xf32, #tpu.memory_space<vmem>>, vector<32x8xf32>
    %cst = arith.constant dense<0.000000e+00> : vector<32x128xf32>
    %2 = tpu.matmul %1, %0, %cst {dimension_numbers = #tpu.dot_dimension_numbers<[1], [0], [0], [1], [0, 0, 1, 1], [], []>} : vector<32x8xf32>, vector<8x128xf32>, vector<32x128xf32> -> vector<32x128xf32>
    %c0_3 = arith.constant 0 : index
    %c0_4 = arith.constant 0 : index
    %3 = vector.load %arg4[%c0_3, %c0_4] : memref<32x1xf32, #tpu.memory_space<vmem>>, vector<32x1xf32>
    %4 = vector.broadcast %3 : vector<32x1xf32> to vector<32x128xf32>
    %5 = arith.addf %2, %4 : vector<32x128xf32>
    %c0_5 = arith.constant 0 : index
    %c0_6 = arith.constant 0 : index
    %6 = vector.load %arg2[%c0_5, %c0_6] : memref<40x128xf32, #tpu.memory_space<vmem>>, vector<32x128xf32>
    %cst_7 = arith.constant 3.000000e-01 : f32
    %7 = vector.broadcast %cst_7 : f32 to vector<32x128xf32>
    %8 = arith.cmpf oge, %6, %7 : vector<32x128xf32>
    %cst_8 = arith.constant 0.000000e+00 : f32
    %9 = vector.broadcast %cst_8 : f32 to vector<32x128xf32>
    %10 = arith.maximumf %5, %9 : vector<32x128xf32>
    %cst_9 = arith.constant 1.42857146 : f32
    %11 = vector.broadcast %cst_9 : f32 to vector<32x128xf32>
    %12 = arith.mulf %10, %11 : vector<32x128xf32>
    %cst_10 = arith.constant 0.000000e+00 : f32
    %13 = vector.broadcast %cst_10 : f32 to vector<32x128xf32>
    %14 = arith.select %8, %12, %13 : vector<32x128xi1>, vector<32x128xf32>
    %c0_11 = arith.constant 0 : index
    %c0_12 = arith.constant 0 : index
    %15 = vector.load %arg5[%c0_11, %c0_12] : memref<8x32xf32, #tpu.memory_space<vmem>>, vector<8x32xf32>
    %cst_13 = arith.constant dense<0.000000e+00> : vector<8x128xf32>
    %16 = tpu.matmul %15, %14, %cst_13 {dimension_numbers = #tpu.dot_dimension_numbers<[1], [0], [0], [1], [0, 0, 1, 1], [], []>} : vector<8x32xf32>, vector<32x128xf32>, vector<8x128xf32> -> vector<8x128xf32>
    %c0_14 = arith.constant 0 : index
    %c0_15 = arith.constant 0 : index
    %17 = vector.load %arg6[%c0_14, %c0_15] : memref<8x1xf32, #tpu.memory_space<vmem>>, vector<8x1xf32>
    %18 = vector.broadcast %17 : vector<8x1xf32> to vector<8x128xf32>
    %19 = arith.addf %16, %18 : vector<8x128xf32>
    %20 = vector.extract_strided_slice %19 {offsets = [0, 0], sizes = [4, 128], strides = [1, 1]} : vector<8x128xf32> to vector<4x128xf32>
    %21 = vector.extract_strided_slice %19 {offsets = [4, 0], sizes = [1, 128], strides = [1, 1]} : vector<8x128xf32> to vector<1x128xf32>
    %cst_16 = arith.constant dense<0xFF800000> : vector<128xf32>
    %22 = vector.multi_reduction <maximumf>, %20, %cst_16 [0] : vector<4x128xf32> to vector<128xf32>
    %23 = vector.shape_cast %22 : vector<128xf32> to vector<1x128xf32>
    %24 = vector.broadcast %23 : vector<1x128xf32> to vector<4x128xf32>
    %25 = arith.subf %20, %24 : vector<4x128xf32>
    %26 = math.exp %25 : vector<4x128xf32>
    %cst_17 = arith.constant dense<0.000000e+00> : vector<128xf32>
    %27 = vector.multi_reduction <add>, %26, %cst_17 [0] : vector<4x128xf32> to vector<128xf32>
    %28 = vector.shape_cast %27 : vector<128xf32> to vector<1x128xf32>
    %29 = math.log %28 : vector<1x128xf32>
    %30 = vector.broadcast %29 : vector<1x128xf32> to vector<4x128xf32>
    %31 = arith.subf %25, %30 : vector<4x128xf32>
    %c32 = arith.constant 32 : index
    %c0_18 = arith.constant 0 : index
    %32 = vector.load %arg2[%c32, %c0_18] : memref<40x128xf32, #tpu.memory_space<vmem>>, vector<4x128xf32>
    %cst_19 = arith.constant 9.99999968E-21 : f32
    %33 = vector.broadcast %cst_19 : f32 to vector<4x128xf32>
    %34 = arith.addf %32, %33 : vector<4x128xf32>
    %35 = math.log %34 : vector<4x128xf32>
    %cst_20 = arith.constant 0.000000e+00 : f32
    %36 = vector.broadcast %cst_20 : f32 to vector<4x128xf32>
    %37 = arith.subf %36, %35 : vector<4x128xf32>
    %cst_21 = arith.constant 9.99999968E-21 : f32
    %38 = vector.broadcast %cst_21 : f32 to vector<4x128xf32>
    %39 = arith.addf %37, %38 : vector<4x128xf32>
    %40 = math.log %39 : vector<4x128xf32>
    %cst_22 = arith.constant 0.000000e+00 : f32
    %41 = vector.broadcast %cst_22 : f32 to vector<4x128xf32>
    %42 = arith.subf %41, %40 : vector<4x128xf32>
    %43 = arith.addf %20, %42 : vector<4x128xf32>
    %44 = tpu.iota {dimensions = array<i32: 0>} : vector<4x128xi32>
    %cst_23 = arith.constant dense<0xFF800000> : vector<128xf32>
    %45 = vector.multi_reduction <maximumf>, %43, %cst_23 [0] : vector<4x128xf32> to vector<128xf32>
    %46 = vector.shape_cast %45 : vector<128xf32> to vector<1x128xf32>
    %47 = vector.broadcast %46 : vector<1x128xf32> to vector<4x128xf32>
    %48 = arith.cmpf oge, %43, %47 : vector<4x128xf32>
    %c4_i32 = arith.constant 4 : i32
    %49 = vector.broadcast %c4_i32 : i32 to vector<4x128xi32>
    %50 = arith.select %48, %44, %49 : vector<4x128xi1>, vector<4x128xi32>
    %cst_24 = arith.constant dense<2147483647> : vector<128xi32>
    %51 = vector.multi_reduction <minsi>, %50, %cst_24 [0] : vector<4x128xi32> to vector<128xi32>
    %52 = vector.shape_cast %51 : vector<128xi32> to vector<1x128xi32>
    %c0_25 = arith.constant 0 : index
    %c0_26 = arith.constant 0 : index
    %53 = vector.load %arg7[%c0_25, %c0_26] : memref<1x128xi32, #tpu.memory_space<vmem>>, vector<1x128xi32>
    tpu.vector_store %arg7[%c0_25, %c0_26], %52 {strides = array<i32>} : memref<1x128xi32, #tpu.memory_space<vmem>>, vector<1x128xi32>,
    %54 = vector.broadcast %52 : vector<1x128xi32> to vector<4x128xi32>
    %55 = arith.cmpi eq, %44, %54 : vector<4x128xi32>
    %cst_27 = arith.constant 0.000000e+00 : f32
    %56 = vector.broadcast %cst_27 : f32 to vector<4x128xf32>
    %57 = arith.select %55, %31, %56 : vector<4x128xi1>, vector<4x128xf32>
    %cst_28 = arith.constant dense<0.000000e+00> : vector<128xf32>
    %58 = vector.multi_reduction <add>, %57, %cst_28 [0] : vector<4x128xf32> to vector<128xf32>
    %59 = vector.shape_cast %58 : vector<128xf32> to vector<1x128xf32>
    %c0_29 = arith.constant 0 : index
    %c0_30 = arith.constant 0 : index
    %60 = vector.load %arg8[%c0_29, %c0_30] : memref<2x128xf32, #tpu.memory_space<vmem>>, vector<1x128xf32>
    tpu.vector_store %arg8[%c0_29, %c0_30], %59 {strides = array<i32>} : memref<2x128xf32, #tpu.memory_space<vmem>>, vector<1x128xf32>,
    %c1 = arith.constant 1 : index
    %c0_31 = arith.constant 0 : index
    %61 = vector.load %arg8[%c1, %c0_31] : memref<2x128xf32, #tpu.memory_space<vmem>>, vector<1x128xf32>
    tpu.vector_store %arg8[%c1, %c0_31], %21 {strides = array<i32>} : memref<2x128xf32, #tpu.memory_space<vmem>>, vector<1x128xf32>,
    return
  }
  func.func @transform_0(%arg0: i32) -> (i32, i32) {
    %c0_i32 = arith.constant 0 : i32
    %c0_i32_0 = arith.constant 0 : i32
    return %c0_i32, %arg0 : i32, i32
  }
  func.func @transform_1(%arg0: i32) -> (i32, i32) {
    %c0_i32 = arith.constant 0 : i32
    %c0_i32_0 = arith.constant 0 : i32
    return %c0_i32, %arg0 : i32, i32
  }
  func.func @transform_2(%arg0: i32) -> (i32, i32) {
    %c0_i32 = arith.constant 0 : i32
    %c0_i32_0 = arith.constant 0 : i32
    %c0_i32_1 = arith.constant 0 : i32
    return %c0_i32, %c0_i32_0 : i32, i32
  }
  func.func @transform_3(%arg0: i32) -> (i32, i32) {
    %c0_i32 = arith.constant 0 : i32
    %c0_i32_0 = arith.constant 0 : i32
    %c0_i32_1 = arith.constant 0 : i32
    return %c0_i32, %c0_i32_0 : i32, i32
  }
  func.func @transform_4(%arg0: i32) -> (i32, i32) {
    %c0_i32 = arith.constant 0 : i32
    %c0_i32_0 = arith.constant 0 : i32
    %c0_i32_1 = arith.constant 0 : i32
    return %c0_i32, %c0_i32_0 : i32, i32
  }
  func.func @transform_5(%arg0: i32) -> (i32, i32) {
    %c0_i32 = arith.constant 0 : i32
    %c0_i32_0 = arith.constant 0 : i32
    %c0_i32_1 = arith.constant 0 : i32
    return %c0_i32, %c0_i32_0 : i32, i32
  }
  func.func @transform_6(%arg0: i32) -> (i32, i32) {
    %c0_i32 = arith.constant 0 : i32
    %c0_i32_0 = arith.constant 0 : i32
    return %c0_i32, %arg0 : i32, i32
  }
  func.func @transform_7(%arg0: i32) -> (i32, i32) {
    %c0_i32 = arith.constant 0 : i32
    %c0_i32_0 = arith.constant 0 : i32
    return %c0_i32, %arg0 : i32, i32
  }
}

</mosaic_0001>

<llo_original>
// kernel: tpu_custom_call.1
$region0: #{tpu_custom_call.1}
  #allocation0 [shape = 'u32[]', space=smem, size = 0x4, offset = 0x4, fixed_abs, tag = 'smem constant byte address 0x4 - core index']
  #allocation1 [shape = 'u32[144,128]{1,0:T(1,128)}', space=vmem, size = 0x12000, scoped, tag = 'internal scratch']
  %s0 = inlined_call_operand.vmem [shape: f32[8,128], index: 0, kind: input, shape index: {}]
  %s1 = inlined_call_operand.vmem [shape: f32[40,128], index: 1, kind: input, shape index: {}]
  %s2 = inlined_call_operand.vmem [shape: f32[32,8], index: 2, kind: input, shape index: {}]
  %s3 = inlined_call_operand.vmem [shape: f32[32,1], index: 3, kind: input, shape index: {}]
  %s4 = inlined_call_operand.vmem [shape: f32[8,32], index: 4, kind: input, shape index: {}]
  %s5 = inlined_call_operand.vmem [shape: f32[8,1], index: 5, kind: input, shape index: {}]
  %s6 = inlined_call_operand.hbm [shape: s32[1,128], index: 6, kind: output, shape index: {0}]
  %s7 = inlined_call_operand.hbm [shape: f32[2,128], index: 7, kind: output, shape index: {1}]
  %8 = xla_tuple %s6, %s7
  %s9 = sld [smem:[#allocation0]]
  $region42: #{tpu_custom_call.1} parent=0
    _
  %s11 = ssub.s32 1, %s9
  %s12 = scalar_select 0, %s11, %s9
  $region1: #{tpu_custom_call.1} parent=0
    #allocation2 [shape = 'u8[512]{0}', space=vmem, size = 0x400, scoped, tag = 'output window, operand 0, single buffered']
    #allocation3 [shape = 's32[1]{0}', space=sflag, size = 0x4, scoped, tag = 'scoped memory for tpu_custom_call.1']
    #allocation4 [shape = 'u8[1024]{0}', space=vmem, size = 0x400, scoped, tag = 'output window, operand 1, single buffered']
    #allocation5 [shape = 's32[1]{0}', space=sflag, size = 0x4, scoped, tag = 'scoped memory for tpu_custom_call.1']
    %13 = vsyncpa [#allocation3], 0
    %14 = vsyncpa [#allocation5], 0
    // Predicated region
    $region2: #{tpu_custom_call.1} parent=1 // pred_check
      _
    $region3: #{tpu_custom_call.1} parent=1 // pred_check_branch
      %16 = sbr.rel (0) target = $region5
    $region4: #{tpu_custom_call.1} parent=1 // pred_region
      _
    $region5: #{tpu_custom_call.1} parent=1 // pred_fallthru
      _
    // Predicated region
    $region6: #{tpu_custom_call.1} parent=1 // pred_check
      _
    $region7: #{tpu_custom_call.1} parent=1 // pred_check_branch
      %18 = sbr.rel (0) target = $region9
    $region8: #{tpu_custom_call.1} parent=1 // pred_region
      _
    $region9: #{tpu_custom_call.1} parent=1 // pred_fallthru
      _
    // Predicated region
    $region10: #{tpu_custom_call.1} parent=1 // pred_check
      _
    $region11: #{tpu_custom_call.1} parent=1 // pred_check_branch
      %20 = sbr.rel (0) target = $region13
    $region12: #{tpu_custom_call.1} parent=1 // pred_region
      _
    $region13: #{tpu_custom_call.1} parent=1 // pred_fallthru
      _
    // Predicated region
    $region14: #{tpu_custom_call.1} parent=1 // pred_check
      _
    $region15: #{tpu_custom_call.1} parent=1 // pred_check_branch
      %22 = sbr.rel (0) target = $region17
    $region16: #{tpu_custom_call.1} parent=1 // pred_region
      _
    $region17: #{tpu_custom_call.1} parent=1 // pred_fallthru
      _
    // Predicated region
    $region18: #{tpu_custom_call.1} parent=1 // pred_check
      _
    $region19: #{tpu_custom_call.1} parent=1 // pred_check_branch
      %24 = sbr.rel (0) target = $region21
    $region20: #{tpu_custom_call.1} parent=1 // pred_region
      _
    $region21: #{tpu_custom_call.1} parent=1 // pred_fallthru
      _
    // Predicated region
    $region22: #{tpu_custom_call.1} parent=1 // pred_check
      _
    $region23: #{tpu_custom_call.1} parent=1 // pred_check_branch
      %26 = sbr.rel (0) target = $region25
    $region24: #{tpu_custom_call.1} parent=1 // pred_region
      _
    $region25: #{tpu_custom_call.1} parent=1 // pred_fallthru
      _
    %v27 = vld [vmem:[%s0] sm:$0xff]
    %v28 = vld [vmem:[%s2] sm:$0xff]
    %v29 = vld [vmem:[%s2 + $0x8] sm:$0xff]
    %v30 = vld [vmem:[%s2 + $0x10] sm:$0xff]
    %v31 = vld [vmem:[%s2 + $0x18] sm:$0xff]
    %v32 = vld [vmem:[%s3] sm:$0xff]
    %v33 = vld [vmem:[%s3 + $0x8] sm:$0xff]
    %v34 = vld [vmem:[%s3 + $0x10] sm:$0xff]
    %v35 = vld [vmem:[%s3 + $0x18] sm:$0xff]
    %37 = vset.pattern.permute.xlu0 0
    %38 = vperm.xlu0 %37, %v32
    %v39 = vpop.permute.xlu0 %38
    %42 = vset.pattern.permute.xlu0 0
    %43 = vperm.xlu0 %42, %v33
    %v44 = vpop.permute.xlu0 %43
    %47 = vset.pattern.permute.xlu0 0
    %48 = vperm.xlu0 %47, %v34
    %v49 = vpop.permute.xlu0 %48
    %52 = vset.pattern.permute.xlu0 0
    %53 = vperm.xlu0 %52, %v35
    %v54 = vpop.permute.xlu0 %53
    %vm56 = vcmask 64512
    %v58 = vsel %vm56, %v28, 0
    %v61 = vsel %vm56, %v29, 0
    %v64 = vsel %vm56, %v30, 0
    %v67 = vsel %vm56, %v31, 0
    %69 = vmatprep.subr.mxu0 0.0
    %70 = vmatpush1.msra.mxu0 %v27
    %71 = vmatprep.subr.mxu0 0.0
    %72 = vmatpush1.msra.mxu0 0.0
    %73 = vmatprep.subr.mxu0 0.0
    %74 = vmatpush1.msra.mxu0 0.0
    %75 = vmatprep.subr.mxu0 0.0
    %76 = vmatpush1.msra.mxu0 0.0
    %77 = vmatprep.subr.mxu0 0.0
    %78 = vmatpush1.msra.mxu0 0.0
    %79 = vmatprep.subr.mxu0 0.0
    %80 = vmatpush1.msra.mxu0 0.0
    %81 = vmatprep.subr.mxu0 0.0
    %82 = vmatpush1.msra.mxu0 0.0
    %83 = vmatprep.subr.mxu0 0.0
    %84 = vmatpush1.msra.mxu0 0.0
    %85 = vmatprep.subr.mxu0 0.0
    %86 = vmatpush1.msra.mxu0 0.0
    %87 = vmatprep.subr.mxu0 0.0
    %88 = vmatpush1.msra.mxu0 0.0
    %89 = vmatprep.subr.mxu0 0.0
    %90 = vmatpush1.msra.mxu0 0.0
    %91 = vmatprep.subr.mxu0 0.0
    %92 = vmatpush1.msra.mxu0 0.0
    %93 = vmatprep.subr.mxu0 0.0
    %94 = vmatpush1.msra.mxu0 0.0
    %95 = vmatprep.subr.mxu0 0.0
    %96 = vmatpush1.msra.mxu0 0.0
    %97 = vmatprep.subr.mxu0 0.0
    %98 = vmatpush1.msra.mxu0 0.0
    %99 = vmatprep.subr.mxu0 0.0
    %100 = vmatpush1.msra.mxu0 0.0
    %101 = vmatprep.subr.mxu0 0.0
    %102 = vmatpush1.msra.mxu0 0.0
    %103 = vmatprep.subr.mxu0 0.0
    %104 = vmatpush1.msra.mxu0 0.0
    %105 = vmatprep.subr.mxu0 0.0
    %106 = vmatpush1.msra.mxu0 0.0
    %107 = vmatprep.subr.mxu0 0.0
    %108 = vmatpush1.msra.mxu0 0.0
    %109 = vmatprep.subr.mxu0 0.0
    %110 = vmatpush1.msra.mxu0 0.0
    %111 = vmatprep.subr.mxu0 0.0
    %112 = vmatpush1.msra.mxu0 0.0
    %113 = vmatprep.subr.mxu0 0.0
    %114 = vmatpush1.msra.mxu0 0.0
    %115 = vmatprep.subr.mxu0 0.0
    %116 = vmatpush1.msra.mxu0 0.0
    %117 = vmatprep.subr.mxu0 0.0
    %118 = vmatpush1.msra.mxu0 0.0
    %119 = vmatprep.subr.mxu0 0.0
    %120 = vmatpush1.msra.mxu0 0.0
    %121 = vmatprep.subr.mxu0 0.0
    %122 = vmatpush1.msra.mxu0 0.0
    %123 = vmatprep.subr.mxu0 0.0
    %124 = vmatpush1.msra.mxu0 0.0
    %125 = vmatprep.subr.mxu0 0.0
    %126 = vmatpush1.msra.mxu0 0.0
    %127 = vmatprep.subr.mxu0 0.0
    %128 = vmatpush1.msra.mxu0 0.0
    %129 = vmatprep.subr.mxu0 0.0
    %130 = vmatpush1.msra.mxu0 0.0
    %131 = vmatprep.subr.mxu0 0.0
    %132 = vmatpush1.msra.mxu0 0.0
    %133 = vmatprep.mubr.f32.mxu0 0.0
    %134 = vmatmul.mubr.f32.gmra.mrb[0].mxu0 %v58
    %v135 = vpop.f32.mrb[0].mxu0
    %v136 = vadd.f32 %v39, %v135
    %v137 = vpop.f32.mrb[0].mxu0
    %138 = vmatprep.mubr.f32.mxu0 0.0
    %139 = vmatmul.mubr.f32.gmra.mrb[0].mxu0 %v61
    %v140 = vpop.f32.mrb[0].mxu0
    %v141 = vadd.f32 %v44, %v140
    %v142 = vpop.f32.mrb[0].mxu0
    %143 = vmatprep.mubr.f32.mxu0 0.0
    %144 = vmatmul.mubr.f32.gmra.mrb[0].mxu0 %v64
    %v145 = vpop.f32.mrb[0].mxu0
    %v146 = vadd.f32 %v49, %v145
    %v147 = vpop.f32.mrb[0].mxu0
    %148 = vmatprep.mubr.f32.mxu0 0.0
    %149 = vmatmul.mubr.f32.gmra.mrb[0].mxu0 %v67
    %v150 = vpop.f32.mrb[0].mxu0
    %v151 = vadd.f32 %v54, %v150
    %v152 = vpop.f32.mrb[0].mxu0
    %153 = vdwg.mxu0
    %v154 = vld [vmem:[%s1] sm:$0xff]
    %v155 = vld [vmem:[%s1 + $0x8] sm:$0xff]
    %v156 = vld [vmem:[%s1 + $0x10] sm:$0xff]
    %v157 = vld [vmem:[%s1 + $0x18] sm:$0xff]
    %vm158 = vcmp.ge.f32.partialorder %v154, 0.3
    %vm159 = vcmp.ge.f32.partialorder %v155, 0.3
    %vm160 = vcmp.ge.f32.partialorder %v156, 0.3
    %vm161 = vcmp.ge.f32.partialorder %v157, 0.3
    %v162 = vmax.f32 %v136, 0.0
    %v163 = vmax.f32 %v141, 0.0
    %v164 = vmax.f32 %v146, 0.0
    %v165 = vmax.f32 %v151, 0.0
    %v166 = vmul.f32 %v162, 1.4285715
    %v167 = vmul.f32 %v163, 1.4285715
    %v168 = vmul.f32 %v164, 1.4285715
    %v169 = vmul.f32 %v165, 1.4285715
    %v170 = vsel %vm158, %v166, 0.0
    %v171 = vsel %vm159, %v167, 0.0
    %v172 = vsel %vm160, %v168, 0.0
    %v173 = vsel %vm161, %v169, 0.0
    %v174 = vld [vmem:[%s4] sm:$0xff]
    %v175 = vld [vmem:[%s5] sm:$0xff]
    %177 = vset.pattern.permute.xlu0 0
    %178 = vperm.xlu0 %177, %v175
    %v179 = vpop.permute.xlu0 %178
    %vm181 = vcmask 261120
    %v183 = vsel %vm181, %v174, 0
    %185 = vmatprep.subr.mxu0 0.0
    %186 = vmatpush1.msra.mxu0 %v170
    %187 = vmatprep.subr.mxu0 0.0
    %188 = vmatpush1.msra.mxu0 %v171
    %189 = vmatprep.subr.mxu0 0.0
    %190 = vmatpush1.msra.mxu0 %v172
    %191 = vmatprep.subr.mxu0 0.0
    %192 = vmatpush1.msra.mxu0 %v173
    %193 = vmatprep.subr.mxu0 0.0
    %194 = vmatpush1.msra.mxu0 0.0
    %195 = vmatprep.subr.mxu0 0.0
    %196 = vmatpush1.msra.mxu0 0.0
    %197 = vmatprep.subr.mxu0 0.0
    %198 = vmatpush1.msra.mxu0 0.0
    %199 = vmatprep.subr.mxu0 0.0
    %200 = vmatpush1.msra.mxu0 0.0
    %201 = vmatprep.subr.mxu0 0.0
    %202 = vmatpush1.msra.mxu0 0.0
    %203 = vmatprep.subr.mxu0 0.0
    %204 = vmatpush1.msra.mxu0 0.0
    %205 = vmatprep.subr.mxu0 0.0
    %206 = vmatpush1.msra.mxu0 0.0
    %207 = vmatprep.subr.mxu0 0.0
    %208 = vmatpush1.msra.mxu0 0.0
    %209 = vmatprep.subr.mxu0 0.0
    %210 = vmatpush1.msra.mxu0 0.0
    %211 = vmatprep.subr.mxu0 0.0
    %212 = vmatpush1.msra.mxu0 0.0
    %213 = vmatprep.subr.mxu0 0.0
    %214 = vmatpush1.msra.mxu0 0.0
    %215 = vmatprep.subr.mxu0 0.0
    %216 = vmatpush1.msra.mxu0 0.0
    %217 = vmatprep.subr.mxu0 0.0
    %218 = vmatpush1.msra.mxu0 0.0
    %219 = vmatprep.subr.mxu0 0.0
    %220 = vmatpush1.msra.mxu0 0.0
    %221 = vmatprep.subr.mxu0 0.0
    %222 = vmatpush1.msra.mxu0 0.0
    %223 = vmatprep.subr.mxu0 0.0
    %224 = vmatpush1.msra.mxu0 0.0
    %225 = vmatprep.subr.mxu0 0.0
    %226 = vmatpush1.msra.mxu0 0.0
    %227 = vmatprep.subr.mxu0 0.0
    %228 = vmatpush1.msra.mxu0 0.0
    %229 = vmatprep.subr.mxu0 0.0
    %230 = vmatpush1.msra.mxu0 0.0
    %231 = vmatprep.subr.mxu0 0.0
    %232 = vmatpush1.msra.mxu0 0.0
    %233 = vmatprep.subr.mxu0 0.0
    %234 = vmatpush1.msra.mxu0 0.0
    %235 = vmatprep.subr.mxu0 0.0
    %236 = vmatpush1.msra.mxu0 0.0
    %237 = vmatprep.subr.mxu0 0.0
    %238 = vmatpush1.msra.mxu0 0.0
    %239 = vmatprep.subr.mxu0 0.0
    %240 = vmatpush1.msra.mxu0 0.0
    %241 = vmatprep.subr.mxu0 0.0
    %242 = vmatpush1.msra.mxu0 0.0
    %243 = vmatprep.subr.mxu0 0.0
    %244 = vmatpush1.msra.mxu0 0.0
    %245 = vmatprep.subr.mxu0 0.0
    %246 = vmatpush1.msra.mxu0 0.0
    %247 = vmatprep.subr.mxu0 0.0
    %248 = vmatpush1.msra.mxu0 0.0
    %249 = vmatprep.mubr.f32.mxu0 0.0
    %250 = vmatmul.mubr.f32.gmra.mrb[0].mxu0 %v183
    %v251 = vpop.f32.mrb[0].mxu0
    %v252 = vadd.f32 %v179, %v251
    %v253 = vpop.f32.mrb[0].mxu0
    %254 = vdwg.mxu0
    %vm255 = vcmask 1043456
    %v256 = vsel %vm255, %v252, -inf
    %v257 = vrot.slane %v256, 4
    %v258 = vmax.f32 %v256, %v257
    %v259 = vrot.slane %v258, 2
    %v260 = vmax.f32 %v258, %v259
    %v261 = vrot.slane %v260, 1
    %v262 = vmax.f32 %v260, %v261
    %v263 = vsub.f32 %v252, %v262
    %v264 = vmul.f32 %v263, 1.442695
    %v265 = vpow.pop %v264
    %v266 = vsel %vm255, %v265, 0.0
    %v267 = vrot.slane %v266, 4
    %v268 = vadd.f32 %v266, %v267
    %v269 = vrot.slane %v268, 2
    %v270 = vadd.f32 %v268, %v269
    %v271 = vrot.slane %v270, 1
    %v272 = vadd.f32 %v270, %v271
    %v273 = vlog2.pop %v272
    %v274 = vmul.f32 %v273, 0.6931472
    %v275 = vsub.f32 %v263, %v274
    %v276 = vld [vmem:[%s1 + $0x20] sm:$0xf]
    %v277 = vadd.f32 %v276, 1e-20
    %v278 = vlog2.pop %v277
    %v279 = vmul.f32 %v278, 0.6931472
    %v280 = vsub.f32 0.0, %v279
    %v281 = vadd.f32 %v280, 1e-20
    %v282 = vlog2.pop %v281
    %v283 = vmul.f32 %v282, 0.6931472
    %v284 = vsub.f32 0.0, %v283
    %v285 = vadd.f32 %v252, %v284
    %v286 = vlaneseq
    %v287 = vshrl.u32 %v286, 7
    %v288 = vsel %vm255, %v285, -inf
    %v289 = vrot.slane %v288, 4
    %v290 = vmax.f32 %v288, %v289
    %v291 = vrot.slane %v290, 2
    %v292 = vmax.f32 %v290, %v291
    %v293 = vrot.slane %v292, 1
    %v294 = vmax.f32 %v292, %v293
    %vm295 = vcmp.ge.f32.partialorder %v285, %v294
    %v296 = vsel %vm295, %v287, 4
    %v297 = vsel %vm255, %v296, 2147483647
    %v298 = vrot.slane %v297, 4
    %vm299 = vcmp.lt.s32.totalorder %v297, %v298
    %v300 = vsel %vm299, %v297, %v298
    %v301 = vrot.slane %v300, 2
    %vm302 = vcmp.lt.s32.totalorder %v300, %v301
    %v303 = vsel %vm302, %v300, %v301
    %v304 = vrot.slane %v303, 1
    %vm305 = vcmp.lt.s32.totalorder %v303, %v304
    %v306 = vsel %vm305, %v303, %v304
    %307 = vst [vmem:[#allocation2] sm:$0x1] %v306
    %vm308 = vcmp.eq.s32.totalorder %v287, %v306
    %v309 = vsel %vm308, %v275, 0.0
    %v310 = vsel %vm255, %v309, 0.0
    %v311 = vrot.slane %v310, 4
    %v312 = vadd.f32 %v310, %v311
    %v313 = vrot.slane %v312, 2
    %v314 = vadd.f32 %v312, %v313
    %v315 = vrot.slane %v314, 1
    %v316 = vadd.f32 %v314, %v315
    %317 = vst [vmem:[#allocation4] sm:$0x1] %v316
    %318 = vst [vmem:[#allocation4 - $0x3] sm:$0x10] %v252
    // Predicated region
    $region26: #{tpu_custom_call.1} parent=1 // pred_check
      _
    $region27: #{tpu_custom_call.1} parent=1 // pred_check_branch
      %320 = sbr.rel (0) target = $region29
    $region28: #{tpu_custom_call.1} parent=1 // pred_region
      %s322 = ssub.s32 16, 16
      %323 = vsyncadd [#allocation3], %s322
      %s325 = sshll.u32 [#allocation2], 4
      %s326 = int_to_ptr.vmem [resolvable:$true] %s325
      %328 = dma.vmem_to_hbm [thread:$0]  %s326, 16, %s6, [#allocation3]
    $region29: #{tpu_custom_call.1} parent=1 // pred_fallthru
      _
    // Predicated region
    $region30: #{tpu_custom_call.1} parent=1 // pred_check
      _
    $region31: #{tpu_custom_call.1} parent=1 // pred_check_branch
      %330 = sbr.rel (0) target = $region33
    $region32: #{tpu_custom_call.1} parent=1 // pred_region
      %s332 = ssub.s32 32, 32
      %333 = vsyncadd [#allocation5], %s332
      %s335 = sshll.u32 [#allocation4], 4
      %s336 = int_to_ptr.vmem [resolvable:$true] %s335
      %338 = dma.vmem_to_hbm [thread:$0]  %s336, 32, %s7, [#allocation5]
    $region33: #{tpu_custom_call.1} parent=1 // pred_fallthru
      _
    // Predicated region
    $region34: #{tpu_custom_call.1} parent=1 // pred_check
      _
    $region35: #{tpu_custom_call.1} parent=1 // pred_check_branch
      %340 = sbr.rel (0) target = $region37
    $region36: #{tpu_custom_call.1} parent=1 // pred_region
      %341 = dma.done [#allocation3], 16
    $region37: #{tpu_custom_call.1} parent=1 // pred_fallthru
      _
    // Predicated region
    $region38: #{tpu_custom_call.1} parent=1 // pred_check
      _
    $region39: #{tpu_custom_call.1} parent=1 // pred_check_branch
      %343 = sbr.rel (0) target = $region41
    $region40: #{tpu_custom_call.1} parent=1 // pred_region
      %344 = dma.done [#allocation5], 32
    $region41: #{tpu_custom_call.1} parent=1 // pred_fallthru
      _
    %345 = vsyncpa [#allocation3], 1
    %346 = vsyncpa [#allocation5], 1

</llo_original>
